<compile_context>
chip_gen: v5e
topology: v5e:2x2
jax: 0.10.0
libtpu: 0.0.40
codegen_flags: <defaults>
</compile_context>

<pallas_src>
import functools

import jax
import jax.numpy as jnp
from jax import lax
from jax.experimental import pallas as pl
from jax.experimental.pallas import tpu as pltpu


def _head_transform_kernel(x_ref, w_ref, p_ref, o_ref, *, eps):
    # x_ref: (TM, H)      activation tile (compute dtype, e.g. bf16)
    # w_ref: (H_out, H_in) PyTorch Linear weight, VMEM-resident, single buffer
    # p_ref: (3, H)       f32: row 0 = bias, row 1 = gamma, row 2 = beta
    # o_ref: (TM, H)      output tile (original input dtype)
    x = x_ref[...]
    w = w_ref[...]

    # Dense: y = x @ W^T + b. Contract dim 1 of both operands (no materialized
    # transpose); MXU accumulates in f32.
    y = lax.dot_general(x, w, (((1,), (1,)), ((), ())),
                        preferred_element_type=jnp.float32)
    y = y + p_ref[0:1, :]

    # mish(y) = y * tanh(softplus(y)), evaluated with a single exp and one
    # (approximate, EUP) reciprocal:
    #   a = exp(-|y|)
    #   y >= 0: tanh(softplus(y)) = (1 + 2a) / (1 + 2a + 2a^2)
    #   y <  0: tanh(softplus(y)) = (a^2 + 2a) / (a^2 + 2a + 2)
    a = jnp.exp(-jnp.abs(y))
    pos = y >= 0.0
    num = jnp.where(pos, 1.0 + 2.0 * a, a * a + 2.0 * a)
    den = num + jnp.where(pos, 2.0 * a * a, 2.0)
    act = y * (num * pl.reciprocal(den, approx=True))

    # LayerNorm over the hidden (last) dim, one-pass statistics in f32.
    h = act.shape[-1]
    s1 = jnp.sum(act, axis=-1, keepdims=True)
    s2 = jnp.sum(act * act, axis=-1, keepdims=True)
    mean = s1 * (1.0 / h)
    var = jnp.maximum(s2 * (1.0 / h) - mean * mean, 0.0)
    normed = (act - mean) * lax.rsqrt(var + eps)

    o_ref[...] = (normed * p_ref[1:2, :] + p_ref[2:3, :]).astype(o_ref.dtype)


def _round_up(x, m):
    return ((x + m - 1) // m) * m


def _vmem_capacity_bytes():
    try:
        return int(pltpu.get_tpu_info().vmem_capacity_bytes)
    except Exception:
        return 64 * 1024 * 1024  # conservative: v7x per-TensorCore VMEM


def _choose_tiling(M, H, x_itemsize, out_itemsize):
    """Returns (TM, vmem_limit_bytes)."""
    vmem_cap = _vmem_capacity_bytes()

    def footprint(tm):
        return (2 * tm * H * x_itemsize          # x tiles, double-buffered
                + 2 * tm * H * out_itemsize      # out tiles, double-buffered
                + H * H * x_itemsize             # resident weight, 1 buffer
                + 8 * _round_up(H, 128) * 4)     # packed params (padded), 1 buf

    # v5e/v6e (128 MiB VMEM) can afford TM up to 1024; keep 512 on v7x (64 MiB).
    tm_max = 1024 if vmem_cap >= 96 * 1024 * 1024 else 512

    if M <= 8:
        tm = M
    elif M <= 512:
        # Small M: make at least 2 grid tiles so both v7x TensorCores get work.
        tm = _round_up(pl.cdiv(M, 2), 8)
    else:
        tm = next((t for t in (1024, 512, 256, 128)
                   if t <= tm_max and M % t == 0), min(512, tm_max))

    # Shrink while the footprint would not fit comfortably in VMEM.
    budget = int(vmem_cap * 0.6)
    while tm > 128 and footprint(tm) > budget:
        tm = max(128, tm // 2)
    # TODO(synk): for H >= 2048 on v7x the resident (H, H) weight alone crowds
    # the 64 MiB VMEM; add a grid axis over the output-H dim so only (H, TN)
    # slabs stay resident.

    fp = footprint(tm)
    vmem_limit = max(fp + (4 << 20), 32 << 20)
    vmem_limit = min(vmem_limit, int(vmem_cap * 0.75))
    vmem_limit = max(vmem_limit, fp + (2 << 20))
    return tm, vmem_limit


def bert_prediction_head_transform(hidden_states, weight, bias, gamma, beta,
                                   *, eps=1e-12):
    """hidden_states: [B, S, H]; weight: [H, H] (PyTorch Linear layout: out x in);
    bias/gamma/beta: [H]."""
    B, S, H = hidden_states.shape
    M = B * S
    out_dtype = hidden_states.dtype

    # bf16 matmul inputs (f32 MXU accumulation + f32 epilogue keep accuracy);
    # halves kernel-side HBM/VMEM bytes and hits the native bf16 MXU rate.
    compute_dtype = jnp.bfloat16 if out_dtype == jnp.float32 else out_dtype
    x2d = hidden_states.reshape(M, H).astype(compute_dtype)
    w = weight.astype(compute_dtype)

    # Pack bias / gamma / beta into one (3, H) f32 block (single resident DMA).
    # TODO(synk): with static weights, hoist this pack (and the bf16 weight cast)
    # out of the per-call hot path.
    params = jnp.stack([bias.astype(jnp.float32),
                        gamma.astype(jnp.float32),
                        beta.astype(jnp.float32)], axis=0)

    TM, vmem_limit = _choose_tiling(M, H,
                                    jnp.dtype(compute_dtype).itemsize,
                                    jnp.dtype(out_dtype).itemsize)
    grid = (pl.cdiv(M, TM),)  # ragged tail handled by masked boundary DMAs

    kernel = functools.partial(_head_transform_kernel, eps=eps)

    out2d = pl.pallas_call(
        kernel,
        out_shape=jax.ShapeDtypeStruct((M, H), out_dtype),
        grid_spec=pltpu.PrefetchScalarGridSpec(
            num_scalar_prefetch=0,
            grid=grid,
            in_specs=[
                # x tiles stream over M (double-buffered by default).
                # TODO(synk): bump to pl.Buffered(3) on v5e if xprof shows
                # exposed DMA on the x tiles.
                pl.BlockSpec((TM, H), lambda i: (i, 0)),
                # Resident weight / params: constant index_map, fetched once,
                # single-buffered to halve their VMEM footprint.
                pl.BlockSpec((H, H), lambda i: (0, 0),
                             pipeline_mode=pl.Buffered(1)),
                pl.BlockSpec((3, H), lambda i: (0, 0),
                             pipeline_mode=pl.Buffered(1)),
            ],
            out_specs=pl.BlockSpec((TM, H), lambda i: (i, 0)),
        ),
        compiler_params=pltpu.CompilerParams(
            # Independent M tiles -> shard across v7x's 2 TensorCores.
            dimension_semantics=("parallel",),
            vmem_limit_bytes=vmem_limit),
    )(x2d, w, params)

    return out2d.reshape(B, S, H)


def _reference(hidden_states, weight, bias, gamma, beta, eps=1e-12):
    x = hidden_states.astype(jnp.float32)
    y = jnp.einsum("bsh,oh->bso", x, weight.astype(jnp.float32)) + bias
    act = y * jnp.tanh(jax.nn.softplus(y))            # mish
    mean = jnp.mean(act, axis=-1, keepdims=True)
    var = jnp.mean((act - mean) ** 2, axis=-1, keepdims=True)
    return (act - mean) * lax.rsqrt(var + eps) * gamma + beta


if __name__ == "__main__":
    # config.hidden_size = 32, config.hidden_act = "mish", layer_norm_eps = 1e-12
    batch, seq, hidden = 2, 8, 32
    eps = 1e-12

    key = jax.random.PRNGKey(0)
    k_x, k_w, k_b, k_g, k_be = jax.random.split(key, 5)

    hidden_states = jax.random.normal(k_x, (batch, seq, hidden), dtype=jnp.float32)
    # Deterministic parameter init (synthetic; mimics small-scale BERT init)
    weight = jax.random.normal(k_w, (hidden, hidden), dtype=jnp.float32) * 0.02
    bias = jax.random.normal(k_b, (hidden,), dtype=jnp.float32) * 0.02
    gamma = jnp.ones((hidden,), dtype=jnp.float32) \
        + jax.random.normal(k_g, (hidden,), dtype=jnp.float32) * 0.01
    beta = jax.random.normal(k_be, (hidden,), dtype=jnp.float32) * 0.01

    out = bert_prediction_head_transform(hidden_states, weight, bias, gamma, beta,
                                          eps=eps)
    out = jax.block_until_ready(out)

    ref = _reference(hidden_states, weight, bias, gamma, beta, eps=eps)
    assert out.shape == (batch, seq, hidden)
    assert out.dtype == hidden_states.dtype
    # bf16 matmul inputs (f32 accumulation / f32 epilogue) -> relaxed tolerance
    # vs. the pure-f32 reference, per review.
    assert jnp.allclose(out, ref, atol=5e-2, rtol=5e-2), \
        f"max abs err {jnp.max(jnp.abs(out - ref))}"

    print("KERNEL_OK")
</pallas_src>

<mosaic_0001>
module attributes {stable_mosaic.version = 11 : i64} {
  func.func @_head_transform_kernel(%arg0: i32, %arg1: memref<8x32xbf16, #tpu.memory_space<vmem>>, %arg2: memref<32x32xbf16, #tpu.memory_space<vmem>>, %arg3: memref<3x32xf32, #tpu.memory_space<vmem>>, %arg4: memref<8x32xf32, #tpu.memory_space<vmem>>) attributes {dimension_semantics = [#tpu.dimension_semantics<parallel>], iteration_bounds = array<i64: 2>, scalar_prefetch = 0 : i64, scratch_operands = 0 : i64, tpu.core_type = #tpu.core_type<tc>, window_params = [{transform_indices = @transform_0, window_bounds = array<i64: 8, 32>}, {pipeline_mode = #tpu.pipeline_mode<synchronous>, transform_indices = @transform_1, window_bounds = array<i64: 32, 32>}, {pipeline_mode = #tpu.pipeline_mode<synchronous>, transform_indices = @transform_2, window_bounds = array<i64: 3, 32>}, {transform_indices = @transform_3, window_bounds = array<i64: 8, 32>}]} {
    %c0 = arith.constant 0 : index
    %c0_0 = arith.constant 0 : index
    %0 = vector.load %arg1[%c0, %c0_0] : memref<8x32xbf16, #tpu.memory_space<vmem>>, vector<8x32xbf16>
    %c0_1 = arith.constant 0 : index
    %c0_2 = arith.constant 0 : index
    %1 = vector.load %arg2[%c0_1, %c0_2] : memref<32x32xbf16, #tpu.memory_space<vmem>>, vector<32x32xbf16>
    %cst = arith.constant dense<0.000000e+00> : vector<8x32xf32>
    %2 = tpu.matmul %0, %1, %cst {dimension_numbers = #tpu.dot_dimension_numbers<[1], [1], [0], [0], [0, 0, 1, 0], [], []>} : vector<8x32xbf16>, vector<32x32xbf16>, vector<8x32xf32> -> vector<8x32xf32>
    %c0_3 = arith.constant 0 : index
    %c0_4 = arith.constant 0 : index
    %3 = vector.load %arg3[%c0_3, %c0_4] : memref<3x32xf32, #tpu.memory_space<vmem>>, vector<1x32xf32>
    %4 = vector.broadcast %3 : vector<1x32xf32> to vector<8x32xf32>
    %5 = arith.addf %2, %4 : vector<8x32xf32>
    %6 = math.absf %5 : vector<8x32xf32>
    %cst_5 = arith.constant 0.000000e+00 : f32
    %7 = vector.broadcast %cst_5 : f32 to vector<8x32xf32>
    %8 = arith.subf %7, %6 : vector<8x32xf32>
    %9 = math.exp %8 : vector<8x32xf32>
    %cst_6 = arith.constant 0.000000e+00 : f32
    %10 = vector.broadcast %cst_6 : f32 to vector<8x32xf32>
    %11 = arith.cmpf oge, %5, %10 : vector<8x32xf32>
    %cst_7 = arith.constant 2.000000e+00 : f32
    %12 = vector.broadcast %cst_7 : f32 to vector<8x32xf32>
    %13 = arith.mulf %12, %9 : vector<8x32xf32>
    %cst_8 = arith.constant 1.000000e+00 : f32
    %14 = vector.broadcast %cst_8 : f32 to vector<8x32xf32>
    %15 = arith.addf %14, %13 : vector<8x32xf32>
    %16 = arith.mulf %9, %9 : vector<8x32xf32>
    %cst_9 = arith.constant 2.000000e+00 : f32
    %17 = vector.broadcast %cst_9 : f32 to vector<8x32xf32>
    %18 = arith.mulf %17, %9 : vector<8x32xf32>
    %19 = arith.addf %16, %18 : vector<8x32xf32>
    %20 = arith.select %11, %15, %19 : vector<8x32xi1>, vector<8x32xf32>
    %cst_10 = arith.constant 2.000000e+00 : f32
    %21 = vector.broadcast %cst_10 : f32 to vector<8x32xf32>
    %22 = arith.mulf %21, %9 : vector<8x32xf32>
    %23 = arith.mulf %22, %9 : vector<8x32xf32>
    %cst_11 = arith.constant 2.000000e+00 : f32
    %24 = vector.broadcast %cst_11 : f32 to vector<8x32xf32>
    %25 = arith.select %11, %23, %24 : vector<8x32xi1>, vector<8x32xf32>
    %26 = arith.addf %20, %25 : vector<8x32xf32>
    %27 = tpu.reciprocal %26 {approx = true} : vector<8x32xf32> -> vector<8x32xf32>
    %28 = arith.mulf %20, %27 : vector<8x32xf32>
    %29 = arith.mulf %5, %28 : vector<8x32xf32>
    %cst_12 = arith.constant dense<0.000000e+00> : vector<8xf32>
    %30 = vector.multi_reduction <add>, %29, %cst_12 [1] : vector<8x32xf32> to vector<8xf32>
    %31 = vector.shape_cast %30 : vector<8xf32> to vector<8x1xf32>
    %32 = arith.mulf %29, %29 : vector<8x32xf32>
    %cst_13 = arith.constant dense<0.000000e+00> : vector<8xf32>
    %33 = vector.multi_reduction <add>, %32, %cst_13 [1] : vector<8x32xf32> to vector<8xf32>
    %34 = vector.shape_cast %33 : vector<8xf32> to vector<8x1xf32>
    %cst_14 = arith.constant 3.125000e-02 : f32
    %35 = vector.broadcast %cst_14 : f32 to vector<8x1xf32>
    %36 = arith.mulf %31, %35 : vector<8x1xf32>
    %cst_15 = arith.constant 3.125000e-02 : f32
    %37 = vector.broadcast %cst_15 : f32 to vector<8x1xf32>
    %38 = arith.mulf %34, %37 : vector<8x1xf32>
    %39 = arith.mulf %36, %36 : vector<8x1xf32>
    %40 = arith.subf %38, %39 : vector<8x1xf32>
    %cst_16 = arith.constant 0.000000e+00 : f32
    %41 = vector.broadcast %cst_16 : f32 to vector<8x1xf32>
    %42 = arith.maximumf %40, %41 : vector<8x1xf32>
    %43 = vector.broadcast %36 : vector<8x1xf32> to vector<8x32xf32>
    %44 = arith.subf %29, %43 : vector<8x32xf32>
    %cst_17 = arith.constant 9.99999996E-13 : f32
    %45 = vector.broadcast %cst_17 : f32 to vector<8x1xf32>
    %46 = arith.addf %42, %45 : vector<8x1xf32>
    %47 = math.rsqrt %46 : vector<8x1xf32>
    %48 = vector.broadcast %47 : vector<8x1xf32> to vector<8x32xf32>
    %49 = arith.mulf %44, %48 : vector<8x32xf32>
    %c1 = arith.constant 1 : index
    %c0_18 = arith.constant 0 : index
    %50 = vector.load %arg3[%c1, %c0_18] : memref<3x32xf32, #tpu.memory_space<vmem>>, vector<1x32xf32>
    %51 = vector.broadcast %50 : vector<1x32xf32> to vector<8x32xf32>
    %52 = arith.mulf %49, %51 : vector<8x32xf32>
    %c2 = arith.constant 2 : index
    %c0_19 = arith.constant 0 : index
    %53 = vector.load %arg3[%c2, %c0_19] : memref<3x32xf32, #tpu.memory_space<vmem>>, vector<1x32xf32>
    %54 = vector.broadcast %53 : vector<1x32xf32> to vector<8x32xf32>
    %55 = arith.addf %52, %54 : vector<8x32xf32>
    %c0_20 = arith.constant 0 : index
    %c0_21 = arith.constant 0 : index
    %56 = vector.load %arg4[%c0_20, %c0_21] : memref<8x32xf32, #tpu.memory_space<vmem>>, vector<8x32xf32>
    tpu.vector_store %arg4[%c0_20, %c0_21], %55 {strides = array<i32>} : memref<8x32xf32, #tpu.memory_space<vmem>>, vector<8x32xf32>,
    return
  }
  func.func @transform_0(%arg0: i32) -> (i32, i32) {
    %c0_i32 = arith.constant 0 : i32
    %c0_i32_0 = arith.constant 0 : i32
    return %arg0, %c0_i32 : i32, i32
  }
  func.func @transform_1(%arg0: i32) -> (i32, i32) {
    %c0_i32 = arith.constant 0 : i32
    %c0_i32_0 = arith.constant 0 : i32
    %c0_i32_1 = arith.constant 0 : i32
    return %c0_i32, %c0_i32_0 : i32, i32
  }
  func.func @transform_2(%arg0: i32) -> (i32, i32) {
    %c0_i32 = arith.constant 0 : i32
    %c0_i32_0 = arith.constant 0 : i32
    %c0_i32_1 = arith.constant 0 : i32
    return %c0_i32, %c0_i32_0 : i32, i32
  }
  func.func @transform_3(%arg0: i32) -> (i32, i32) {
    %c0_i32 = arith.constant 0 : i32
    %c0_i32_0 = arith.constant 0 : i32
    return %arg0, %c0_i32 : i32, i32
  }
}

</mosaic_0001>

<llo_original>
// kernel: tpu_custom_call.1
$region0: #{tpu_custom_call.1}
  #allocation0 [shape = 'u32[]', space=smem, size = 0x4, offset = 0x4, fixed_abs, tag = 'smem constant byte address 0x4 - core index']
  #allocation1 [shape = 'u32[72,128]{1,0:T(1,128)}', space=vmem, size = 0x9000, scoped, tag = 'internal scratch']
  %s0 = inlined_call_operand.hbm [shape: bf16[16,32], index: 0, kind: input, shape index: {}]
  %s1 = inlined_call_operand.hbm [shape: bf16[32,32], index: 1, kind: input, shape index: {}]
  %s2 = inlined_call_operand.hbm [shape: f32[3,32], index: 2, kind: input, shape index: {}]
  %s3 = inlined_call_operand.hbm [shape: f32[16,32], index: 3, kind: output, shape index: {}]
  %s4 = sld [smem:[#allocation0]]
  $region57: #{tpu_custom_call.1} parent=0
    _
  %s6 = ssub.s32 1, %s4
  %s7 = scalar_select 0, %s6, %s4
  $region1: #{tpu_custom_call.1} parent=0
    #allocation2 [shape = 'u8[4096]{0}', space=vmem, size = 0x1000, scoped, tag = 'input window, operand 0']
    #allocation3 [shape = 's32[2]{0}', space=sflag, size = 0x8, scoped, tag = 'scoped memory for tpu_custom_call.1']
    #allocation4 [shape = 's32[2]{0}', space=sflag, size = 0x8, scoped, tag = 'scoped memory for tpu_custom_call.1']
    #allocation5 [shape = 'u8[8192]{0}', space=vmem, size = 0x2000, scoped, tag = 'input window, operand 1, single buffered']
    #allocation6 [shape = 's32[1]{0}', space=sflag, size = 0x4, scoped, tag = 'scoped memory for tpu_custom_call.1']
    #allocation7 [shape = 'u8[2048]{0}', space=vmem, size = 0x800, scoped, tag = 'input window, operand 2, single buffered']
    #allocation8 [shape = 'u8[8192]{0}', space=vmem, size = 0x2000, scoped, tag = 'output window, operand 0']
    %8 = vsyncpa [#allocation3], 0
    %s9 = scalar_lea.sflag [#allocation3], 1
    %10 = vsyncpa %s9, 0
    %11 = vsyncpa [#allocation6], 0
    %12 = vsyncpa [#allocation4], 0
    %s13 = scalar_lea.sflag [#allocation4], 1
    %14 = vsyncpa %s13, 0
    loop: start=0, step=1, limit=4
    $region2: #{tpu_custom_call.1} parent=1 // loop_pre_header
      _
    $region3: #{tpu_custom_call.1} parent=1 // loop_header
      %s16 = sphi 0, %s20
      %p17 = scmp.ge.s32.totalorder %s16, 4
      %s26 = sphi 0, %s28
      %s29 = sphi 0, %s26
      %s30 = sphi 0, %s29
      %s46 = sphi 0, %s30
      %s50 = sphi 0, %s50
      %s52 = sphi 0, %s50
      %s53 = sphi 0, %s52
      %s67 = sphi 0, %s53
      %s71 = sphi 0, %s71
      %s73 = sphi 0, %s71
      %s74 = sphi 0, %s73
      %s88 = sphi 0, %s74
      %s94 = sphi 0, %s96
      %s97 = sphi 0, %s94
      %s98 = sphi 0, %s97
      %s114 = sphi 0, %s98
    $region4: #{tpu_custom_call.1} parent=1 // loop_header_branch
      %19 = sbr.rel (%p17) target = $region8
    $region5: #{tpu_custom_call.1} parent=1 // loop_body
      %s21 = ssub.s32 %s16, 1
      %s22 = ssub.s32 %s16, 2
      %s23 = sadd.s32 %s16, 1
      %s24 = ssub.s32 %s16, %s23
      %p25 = scmp.eq.s32.totalorder %s24, 0
      %s27 = sadd.s32 %s26, 1
      %s28 = scalar_select %p25, %s26, %s27
      %p31 = pneg %p25
      %p32 = scmp.eq.s32.totalorder %s16, 1
      %p33 = por %p31, %p32
      %p34 = scmp.ne.s32.totalorder %s26, %s29
      %p35 = scmp.eq.s32.totalorder %s16, 0
      %p36 = por %p34, %p35
      %p37 = scmp.ne.s32.totalorder %s26, %s29
      %p38 = scmp.eq.s32.totalorder %s21, 1
      %p39 = por %p37, %p38
      %p40 = scmp.ne.s32.totalorder %s29, %s30
      %p41 = scmp.eq.s32.totalorder %s21, 0
      %p42 = por %p40, %p41
      %p43 = scmp.ne.s32.totalorder %s29, %s30
      %p44 = scmp.eq.s32.totalorder %s22, 1
      %p45 = por %p43, %p44
      %p47 = scmp.ne.s32.totalorder %s30, %s46
      %p48 = scmp.eq.s32.totalorder %s22, 0
      %p49 = por %p47, %p48
      %s51 = sadd.s32 %s50, 1
      %p54 = scmp.eq.s32.totalorder %s16, 1
      %p55 = scmp.ne.s32.totalorder %s50, %s52
      %p56 = scmp.eq.s32.totalorder %s16, 0
      %p57 = por %p55, %p56
      %p58 = scmp.ne.s32.totalorder %s50, %s52
      %p59 = scmp.eq.s32.totalorder %s21, 1
      %p60 = por %p58, %p59
      %p61 = scmp.ne.s32.totalorder %s52, %s53
      %p62 = scmp.eq.s32.totalorder %s21, 0
      %p63 = por %p61, %p62
      %p64 = scmp.ne.s32.totalorder %s52, %s53
      %p65 = scmp.eq.s32.totalorder %s22, 1
      %p66 = por %p64, %p65
      %p68 = scmp.ne.s32.totalorder %s53, %s67
      %p69 = scmp.eq.s32.totalorder %s22, 0
      %p70 = por %p68, %p69
      %s72 = sadd.s32 %s71, 1
      %p75 = scmp.eq.s32.totalorder %s16, 1
      %p76 = scmp.ne.s32.totalorder %s71, %s73
      %p77 = scmp.eq.s32.totalorder %s16, 0
      %p78 = por %p76, %p77
      %p79 = scmp.ne.s32.totalorder %s71, %s73
      %p80 = scmp.eq.s32.totalorder %s21, 1
      %p81 = por %p79, %p80
      %p82 = scmp.ne.s32.totalorder %s73, %s74
      %p83 = scmp.eq.s32.totalorder %s21, 0
      %p84 = por %p82, %p83
      %p85 = scmp.ne.s32.totalorder %s73, %s74
      %p86 = scmp.eq.s32.totalorder %s22, 1
      %p87 = por %p85, %p86
      %p89 = scmp.ne.s32.totalorder %s74, %s88
      %p90 = scmp.eq.s32.totalorder %s22, 0
      %p91 = por %p89, %p90
      %s92 = ssub.s32 %s16, %s23
      %p93 = scmp.eq.s32.totalorder %s92, 0
      %s95 = sadd.s32 %s94, 1
      %s96 = scalar_select %p93, %s94, %s95
      %p99 = pneg %p93
      %p100 = scmp.eq.s32.totalorder %s16, 1
      %p101 = por %p99, %p100
      %p102 = scmp.ne.s32.totalorder %s94, %s97
      %p103 = scmp.eq.s32.totalorder %s16, 0
      %p104 = por %p102, %p103
      %p105 = scmp.ne.s32.totalorder %s94, %s97
      %p106 = scmp.eq.s32.totalorder %s21, 1
      %p107 = por %p105, %p106
      %p108 = scmp.ne.s32.totalorder %s97, %s98
      %p109 = scmp.eq.s32.totalorder %s21, 0
      %p110 = por %p108, %p109
      %p111 = scmp.ne.s32.totalorder %s97, %s98
      %p112 = scmp.eq.s32.totalorder %s22, 1
      %p113 = por %p111, %p112
      %p115 = scmp.ne.s32.totalorder %s98, %s114
      %p116 = scmp.eq.s32.totalorder %s22, 0
      %p117 = por %p115, %p116
      %p118 = scmp.le.s32.totalorder 1, %s16
      %p119 = scmp.lt.s32.totalorder %s16, 3
      %p120 = pnand %p118, %p119
      %p121 = pneg %p120
      // Predicated region
      $region9: #{tpu_custom_call.1} parent=5 // pred_check
        _
      $region10: #{tpu_custom_call.1} parent=5 // pred_check_branch
        %123 = sbr.rel (%p120) target = $region12
      $region11: #{tpu_custom_call.1} parent=5 // pred_region
        %s124 = ssub.s32 %s16, 1
        // Predicated region
        $region13: #{tpu_custom_call.1} parent=11 // pred_check
          %p125 = pneg %p63
        $region14: #{tpu_custom_call.1} parent=11 // pred_check_branch
          %127 = sbr.rel (%p125) target = $region16
        $region15: #{tpu_custom_call.1} parent=11 // pred_region
          %129 = vsyncadd [#allocation6], 0
          %s130 = sshll.u32 %s1, 4
          %s131 = int_to_ptr.hbm [resolvable:$true] %s130
          %s132 = sshll.u32 [#allocation5], 4
          %s133 = int_to_ptr.vmem [resolvable:$true] %s132
          %138 = dma.hbm_to_vmem [thread:$0]  %s131, 256, %s133, [#allocation6], 64, 64, 4
        $region16: #{tpu_custom_call.1} parent=11 // pred_fallthru
          _
        // Predicated region
        $region17: #{tpu_custom_call.1} parent=11 // pred_check
          %p139 = pneg %p84
        $region18: #{tpu_custom_call.1} parent=11 // pred_check_branch
          %141 = sbr.rel (%p139) target = $region20
        $region19: #{tpu_custom_call.1} parent=11 // pred_region
          %143 = vsyncadd [#allocation6], 0
          %s145 = sshll.u32 %s2, 4
          %s146 = int_to_ptr.hbm [resolvable:$true] %s145
          %s147 = sshll.u32 [#allocation7], 4
          %s148 = int_to_ptr.vmem [resolvable:$true] %s147
          %150 = dma.hbm_to_vmem [thread:$0]  %s146, 64, %s148, [#allocation6]
        $region20: #{tpu_custom_call.1} parent=11 // pred_fallthru
          _
      $region12: #{tpu_custom_call.1} parent=5 // pred_fallthru
        _
      %p151 = scmp.lt.s32.totalorder %s16, 2
      // Predicated region
      $region21: #{tpu_custom_call.1} parent=5 // pred_check
        %p152 = pneg %p151
      $region22: #{tpu_custom_call.1} parent=5 // pred_check_branch
        %154 = sbr.rel (%p152) target = $region24
      $region23: #{tpu_custom_call.1} parent=5 // pred_region
        // Predicated region
        $region25: #{tpu_custom_call.1} parent=23 // pred_check
          %p155 = pneg %p36
        $region26: #{tpu_custom_call.1} parent=23 // pred_check_branch
          %157 = sbr.rel (%p155) target = $region28
        $region27: #{tpu_custom_call.1} parent=23 // pred_region
          %s158 = sand.u32 %s26, 1
          %s159 = scalar_lea.sflag [#allocation3], %s158
          %s160 = sand.u32 %s26, 1
          %s161 = smul.addr %s160, 4
          %s162 = scalar_lea.vmem [#allocation2], %s161
          %164 = vsyncadd %s159, 0
          %s165 = smul.addr %s16, 4
          %s166 = scalar_lea.hbm %s0, %s165
          %s168 = sshll.u32 %s166, 4
          %s169 = int_to_ptr.hbm [resolvable:$true] %s168
          %s170 = sshll.u32 %s162, 4
          %s171 = int_to_ptr.vmem [resolvable:$true] %s170
          %173 = dma.hbm_to_vmem [thread:$0]  %s169, 64, %s171, %s159
        $region28: #{tpu_custom_call.1} parent=23 // pred_fallthru
          _
      $region24: #{tpu_custom_call.1} parent=5 // pred_fallthru
        _
      %p174 = scmp.le.s32.totalorder 1, %s16
      %p175 = scmp.lt.s32.totalorder %s16, 3
      %p176 = pnand %p174, %p175
      %p177 = pneg %p176
      // Predicated region
      $region29: #{tpu_custom_call.1} parent=5 // pred_check
        _
      $region30: #{tpu_custom_call.1} parent=5 // pred_check_branch
        %179 = sbr.rel (%p176) target = $region32
      $region31: #{tpu_custom_call.1} parent=5 // pred_region
        %s180 = ssub.s32 %s16, 1
        %s181 = sand.u32 %s29, 1
        %s182 = scalar_lea.sflag [#allocation3], %s181
        %s183 = sand.u32 %s29, 1
        %s184 = smul.addr %s183, 4
        %s185 = scalar_lea.vmem [#allocation2], %s184
        // Predicated region
        $region33: #{tpu_custom_call.1} parent=31 // pred_check
          %p186 = pneg %p42
        $region34: #{tpu_custom_call.1} parent=31 // pred_check_branch
          %188 = sbr.rel (%p186) target = $region36
        $region35: #{tpu_custom_call.1} parent=31 // pred_region
          %190 = dma.done %s182, 64
        $region36: #{tpu_custom_call.1} parent=31 // pred_fallthru
          _
        // Predicated region
        $region37: #{tpu_custom_call.1} parent=31 // pred_check
          %p191 = pneg %p63
        $region38: #{tpu_custom_call.1} parent=31 // pred_check_branch
          %193 = sbr.rel (%p191) target = $region40
        $region39: #{tpu_custom_call.1} parent=31 // pred_region
          %195 = dma.done [#allocation6], 256
        $region40: #{tpu_custom_call.1} parent=31 // pred_fallthru
          _
        // Predicated region
        $region41: #{tpu_custom_call.1} parent=31 // pred_check
          %p196 = pneg %p84
        $region42: #{tpu_custom_call.1} parent=31 // pred_check_branch
          %198 = sbr.rel (%p196) target = $region44
        $region43: #{tpu_custom_call.1} parent=31 // pred_region
          %200 = dma.done [#allocation6], 64
        $region44: #{tpu_custom_call.1} parent=31 // pred_fallthru
          _
        %s201 = sand.u32 %s29, 1
        %s202 = scalar_lea.sflag [#allocation3], %s201
        %s203 = sand.u32 %s29, 1
        %s204 = smul.addr %s203, 4
        %s205 = scalar_lea.vmem [#allocation2], %s204
        %p206 = pneg %p42
        %p207 = pneg %p39
        %p208 = pneg %p63
        %p209 = pneg %p60
        %p210 = pneg %p84
        %p211 = pneg %p81
        %p212 = pneg %p110
        %p213 = pneg %p107
        %s214 = sand.u32 %s97, 1
        %s215 = scalar_lea.sflag [#allocation4], %s214
        %s216 = sand.u32 %s97, 1
        %s217 = smul.addr %s216, 8
        %s218 = scalar_lea.vmem [#allocation8], %s217
        %v220 = vld [vmem:[%s185] sm:$0xf]
        %v221 = vld [vmem:[#allocation5] sm:$0xf]
        %v222 = vld [vmem:[#allocation5 + $0x4] sm:$0xf]
        %v223 = vld [vmem:[#allocation5 + $0x8] sm:$0xf]
        %v224 = vld [vmem:[#allocation5 + $0xc] sm:$0xf]
        %v225 = vld [vmem:[#allocation7] sm:$0x1]
        %v226 = vperm.slane %v225, 0
        %v231 = vunpack.c.l.b16 %v221
        %v232 = vunpack.c.l.b16 %v222
        %v233 = vunpack.c.l.b16 %v223
        %v234 = vunpack.c.l.b16 %v224
        %v235 = vpack.c.b16 %v232, %v231
        %v236 = vpack.c.b16 %v234, %v233
        %vm237 = vcmask 261120
        %v239 = vsel %vm237, %v220, 0
        %v242 = vsel %vm237, %v235, 0
        %v245 = vsel %vm237, %v236, 0
        %247 = vmatpush.bf16.xpose.msra.mxu0 0
        %248 = vmatpush.bf16.xpose.msra.mxu0 0
        %249 = vmatpush.bf16.xpose.msra.mxu0 0
        %250 = vmatpush.bf16.xpose.msra.mxu0 0
        %251 = vmatpush.bf16.xpose.msra.mxu0 0
        %252 = vmatpush.bf16.xpose.msra.mxu0 0
        %253 = vmatpush.bf16.xpose.msra.mxu0 %v245
        %254 = vmatpush.bf16.xpose.msra.mxu0 %v242
        %255 = vmatmul.bf16.gmra.mxu0 %v239
        %v256 = vpop.f32.mrf.mxu0
        %v257 = vadd.f32 %v226, %v256
        %v258 = vpop.f32.mrf.mxu0
        %259 = vdwg.mxu0
        %v260 = vand.u32 2147483647, %v257
        %v261 = vsub.f32 0.0, %v260
        %v262 = vmul.f32 %v261, 1.442695
        %v263 = vpow.pop %v262
        %vm264 = vcmp.ge.f32.partialorder %v257, 0.0
        %v265 = vmul.f32 %v263, 2.0
        %v266 = vadd.f32 %v265, 1.0
        %v267 = vmul.f32 %v263, %v263
        %v268 = vadd.f32 %v267, %v265
        %v269 = vsel %vm264, %v266, %v268
        %v270 = vmul.f32 %v265, %v263
        %v271 = vsel %vm264, %v270, 2.0
        %v272 = vadd.f32 %v269, %v271
        %v273 = vrcp.pop %v272
        %v274 = vmul.f32 %v269, %v273
        %v275 = vmul.f32 %v257, %v274
        %v276 = vsel %vm237, %v275, 0.0
        %277 = vadd.xlane.f32.xlu0 %v276
        %v278 = vpop.xlane.xlu0 %277
        %v279 = vmul.f32 %v275, %v275
        %v280 = vsel %vm237, %v279, 0.0
        %281 = vadd.xlane.f32.xlu0 %v280
        %v282 = vpop.xlane.xlu0 %281
        %v283 = vmul.f32 %v278, 0.03125
        %v284 = vmul.f32 %v282, 0.03125
        %v285 = vmul.f32 %v283, %v283
        %v286 = vsub.f32 %v284, %v285
        %v287 = vmax.f32 %v286, 0.0
        %v288 = vsub.f32 %v275, %v283
        %v289 = vadd.f32 %v287, 1e-12
        %v290 = vrsqrt.pop %v289
        %v291 = vmul.f32 %v290, %v289
        %v292 = vmul.f32 %v291, %v290
        %v293 = vmul.f32 0.5, %v292
        %v294 = vsub.f32 1.5, %v293
        %v295 = vmul.f32 %v290, %v294
        %vm296 = vweird.f32 %v289
        %vm297 = vweird.f32 %v290
        %vm298 = vmor %vm296, %vm297
        %v299 = vsel %vm298, %v290, %v295
        %v300 = vmul.f32 %v288, %v299
        %v301 = vld [vmem:[#allocation7 + $0x1] sm:$0x1]
        %v302 = vperm.slane %v301, 0
        %v303 = vmul.f32 %v300, %v302
        %v304 = vld [vmem:[#allocation7 + $0x2] sm:$0x1]
        %v305 = vperm.slane %v304, 0
        %v306 = vadd.f32 %v303, %v305
        %307 = vst.msk [vmem:[%s218] sm:$0xff] %vm237, %v306
        %s308 = sand.u32 %s97, 1
        %s309 = scalar_lea.sflag [#allocation4], %s308
        %s310 = sand.u32 %s97, 1
        %s311 = smul.addr %s310, 8
        %s312 = scalar_lea.vmem [#allocation8], %s311
        // Predicated region
        $region45: #{tpu_custom_call.1} parent=31 // pred_check
          %p313 = pneg %p107
        $region46: #{tpu_custom_call.1} parent=31 // pred_check_branch
          %315 = sbr.rel (%p313) target = $region48
        $region47: #{tpu_custom_call.1} parent=31 // pred_region
          %317 = vsyncadd %s309, 0
          %s318 = smul.addr %s21, 8
          %s319 = scalar_lea.hbm %s3, %s318
          %s321 = sshll.u32 %s312, 4
          %s322 = int_to_ptr.vmem [resolvable:$true] %s321
          %s323 = sshll.u32 %s319, 4
          %s324 = int_to_ptr.hbm [resolvable:$true] %s323
          %326 = dma.vmem_to_hbm [thread:$0]  %s322, 128, %s324, %s309
        $region48: #{tpu_custom_call.1} parent=31 // pred_fallthru
          _
      $region32: #{tpu_custom_call.1} parent=5 // pred_fallthru
        _
      %p327 = scmp.le.s32.totalorder 2, %s16
      // Predicated region
      $region49: #{tpu_custom_call.1} parent=5 // pred_check
        %p328 = pneg %p327
      $region50: #{tpu_custom_call.1} parent=5 // pred_check_branch
        %330 = sbr.rel (%p328) target = $region52
      $region51: #{tpu_custom_call.1} parent=5 // pred_region
        %s331 = ssub.s32 %s16, 2
        // Predicated region
        $region53: #{tpu_custom_call.1} parent=51 // pred_check
          %p332 = pneg %p113
        $region54: #{tpu_custom_call.1} parent=51 // pred_check_branch
          %334 = sbr.rel (%p332) target = $region56
        $region55: #{tpu_custom_call.1} parent=51 // pred_region
          %s335 = sand.u32 %s98, 1
          %s336 = scalar_lea.sflag [#allocation4], %s335
          %s337 = sand.u32 %s98, 1
          %s338 = smul.addr %s337, 8
          %s339 = scalar_lea.vmem [#allocation8], %s338
          %341 = dma.done %s336, 128
        $region56: #{tpu_custom_call.1} parent=51 // pred_fallthru
          _
      $region52: #{tpu_custom_call.1} parent=5 // pred_fallthru
        _
    $region6: #{tpu_custom_call.1} parent=1 // loop_footer
      %s20 = sadd.s32 1, %s16
    $region7: #{tpu_custom_call.1} parent=1 // loop_footer_branch
      %15 = sbr.rel target = $region3
    $region8: #{tpu_custom_call.1} parent=1 // loop_exit
      _
    %342 = vsyncpa [#allocation3], 1
    %s343 = scalar_lea.sflag [#allocation3], 1
    %344 = vsyncpa %s343, 1
    %345 = vsyncpa [#allocation6], 1
    %346 = vsyncpa [#allocation4], 1
    %s347 = scalar_lea.sflag [#allocation4], 1
    %348 = vsyncpa %s347, 1

</llo_original>
